<compile_context>
chip_gen: v7x
topology: tpu7x:2x2x1
jax: 0.10.0
libtpu: 0.0.40
codegen_flags: <defaults>
</compile_context>

<pallas_src>
import functools

import jax
import jax.numpy as jnp
from jax.experimental import pallas as pl
from jax.experimental.pallas import tpu as pltpu

# Feature sizes of the PyTorch Decoder: 64 -> 50 -> 20 -> 2
D_IN, D_H1, D_H2, D_OUT = 64, 50, 20, 2


def _round_up(n, m):
    return ((n + m - 1) // m) * m


def _cdiv(a, b):
    return (a + b - 1) // b


def decoder_kernel(x_ref, w1_ref, w2_ref, w3_ref, b1_ref, b2_ref, b3_ref, o_ref):
    """One (TB, 64) batch tile -> (TB, 2) output tile.

    x_ref  : (TB, 64)  f32/bf16, natural row-major layout (cast to bf16 in VMEM)
    w*_ref : (in, out) bf16 weights, resident across the grid
    b*_ref : (1, out)  f32 biases
    o_ref  : (TB, 2)   f32
    """
    x = x_ref[...].astype(jnp.bfloat16)

    # fc1 + ReLU : (TB,64) @ (64,50) -> (TB,50), f32 accumulation on the MXU.
    h1 = jnp.dot(x, w1_ref[...], preferred_element_type=jnp.float32)
    h1 = jnp.maximum(h1 + b1_ref[...], 0.0)

    # fc2 + ReLU : (TB,50) @ (50,20) -> (TB,20)
    h2 = jnp.dot(h1.astype(jnp.bfloat16), w2_ref[...],
                 preferred_element_type=jnp.float32)
    h2 = jnp.maximum(h2 + b2_ref[...], 0.0)

    # fc3 : (TB,20) @ (20,2) -> (TB,2)   (full output rows, contiguous HBM writeback)
    out = jnp.dot(h2.astype(jnp.bfloat16), w3_ref[...],
                  preferred_element_type=jnp.float32)
    o_ref[...] = out + b3_ref[...]


@functools.partial(jax.jit, static_argnames=("tb",))
def decoder_forward(x, params, *, tb=4096):
    """x: (B, 64) float32 (or bfloat16) -> (B, 2) float32, same as the nn.Module."""
    B = x.shape[0]

    # Batch tiling:
    #  - pad the batch only to a multiple of 128 rows (not to a multiple of TB),
    #  - tile up to `tb` rows so the per-grid-step overhead amortizes,
    #  - keep >= 2 grid steps when possible so v7x's two TCs split the batch.
    B128 = _round_up(max(B, 1), 128)
    max_steps = B128 // 128
    num_steps = min(max(2, _cdiv(B128, tb)), max_steps)
    TB = _round_up(_cdiv(B128, num_steps), 128)
    num_steps = _cdiv(B128, TB)
    B_pad = num_steps * TB

    # Zero-pad the batch tail (elided by XLA when B == B_pad).
    if B_pad != B:
        x = jnp.pad(x, ((0, B_pad - B), (0, 0)))

    w1, w2, w3 = params["w1"], params["w2"], params["w3"]
    b1, b2, b3 = params["b1"], params["b2"], params["b3"]

    flops = 2 * B_pad * (D_IN * D_H1 + D_H1 * D_H2 + D_H2 * D_OUT)
    bytes_accessed = (x.size * x.dtype.itemsize
                      + (w1.size + w2.size + w3.size) * 2
                      + (b1.size + b2.size + b3.size) * 4
                      + B_pad * D_OUT * 4)

    out = pl.pallas_call(
        decoder_kernel,
        out_shape=jax.ShapeDtypeStruct((B_pad, D_OUT), jnp.float32),
        grid=(num_steps,),
        in_specs=[
            pl.BlockSpec((TB, D_IN), lambda i: (i, 0)),       # x, tiled over batch
            pl.BlockSpec((D_IN, D_H1), lambda i: (0, 0)),     # weights stay resident
            pl.BlockSpec((D_H1, D_H2), lambda i: (0, 0)),
            pl.BlockSpec((D_H2, D_OUT), lambda i: (0, 0)),
            pl.BlockSpec((1, D_H1), lambda i: (0, 0)),        # biases
            pl.BlockSpec((1, D_H2), lambda i: (0, 0)),
            pl.BlockSpec((1, D_OUT), lambda i: (0, 0)),
        ],
        out_specs=pl.BlockSpec((TB, D_OUT), lambda i: (i, 0)),
        compiler_params=pltpu.CompilerParams(
            dimension_semantics=("parallel",),   # v7x: shard batch tiles across TCs
            vmem_limit_bytes=32 * 1024 * 1024,
        ),
        cost_estimate=pl.CostEstimate(
            flops=flops, transcendentals=0, bytes_accessed=bytes_accessed),
    )(x, w1, w2, w3, b1, b2, b3)

    # Drop zero-padded rows (they hold relu(bias) garbage). No-op when B == B_pad.
    return out[:B]


def init_params(key):
    """Deterministic init mimicking nn.Linear's uniform(-1/sqrt(fan_in), +)."""
    def linear(k, fan_in, fan_out):
        kw, kb = jax.random.split(k)
        bound = 1.0 / jnp.sqrt(fan_in)
        w = jax.random.uniform(kw, (fan_out, fan_in), jnp.float32, -bound, bound)
        b = jax.random.uniform(kb, (fan_out,), jnp.float32, -bound, bound)
        return w, b

    k1, k2, k3 = jax.random.split(key, 3)
    w1, b1 = linear(k1, D_IN, D_H1)
    w2, b2 = linear(k2, D_H1, D_H2)
    w3, b3 = linear(k3, D_H2, D_OUT)

    # Store weights transposed to (in, out) so the kernel runs plain NN matmuls.
    return {
        "w1": w1.T.astype(jnp.bfloat16),       # (64, 50)
        "w2": w2.T.astype(jnp.bfloat16),       # (50, 20)
        "w3": w3.T.astype(jnp.bfloat16),       # (20, 2)
        "b1": b1.reshape(1, D_H1),             # f32 biases as (1, out) rows
        "b2": b2.reshape(1, D_H2),
        "b3": b3.reshape(1, D_OUT),
    }


def reference_forward(x, params):
    """Pure-JAX reference using the same bf16-rounded operands as the kernel."""
    w1 = params["w1"].astype(jnp.float32)
    w2 = params["w2"].astype(jnp.float32)
    w3 = params["w3"].astype(jnp.float32)
    b1, b2, b3 = params["b1"], params["b2"], params["b3"]

    xf = x.astype(jnp.bfloat16).astype(jnp.float32)
    h1 = jnp.maximum(xf @ w1 + b1, 0.0)
    h1 = h1.astype(jnp.bfloat16).astype(jnp.float32)
    h2 = jnp.maximum(h1 @ w2 + b2, 0.0)
    h2 = h2.astype(jnp.bfloat16).astype(jnp.float32)
    return h2 @ w3 + b3


if __name__ == "__main__":
    key = jax.random.PRNGKey(0)
    kx, kp = jax.random.split(key)

    B = 8
    x = jax.random.normal(kx, (B, D_IN), jnp.float32)
    params = init_params(kp)

    out = decoder_forward(x, params)
    out = jax.block_until_ready(out)

    ref = reference_forward(x, params)
    assert out.shape == (B, D_OUT), out.shape
    assert jnp.allclose(out, ref, atol=1e-3, rtol=1e-3), "mismatch vs reference"

    print("KERNEL_OK")
</pallas_src>

<mosaic_0001>
module attributes {stable_mosaic.version = 11 : i64} {
  func.func @decoder_kernel(%arg0: i32, %arg1: memref<128x64xf32, #tpu.memory_space<vmem>>, %arg2: memref<64x50xbf16, #tpu.memory_space<vmem>>, %arg3: memref<50x20xbf16, #tpu.memory_space<vmem>>, %arg4: memref<20x2xbf16, #tpu.memory_space<vmem>>, %arg5: memref<1x50xf32, #tpu.memory_space<vmem>>, %arg6: memref<1x20xf32, #tpu.memory_space<vmem>>, %arg7: memref<1x2xf32, #tpu.memory_space<vmem>>, %arg8: memref<128x2xf32, #tpu.memory_space<vmem>>) attributes {dimension_semantics = [#tpu.dimension_semantics<parallel>], iteration_bounds = array<i64: 1>, scalar_prefetch = 0 : i64, scratch_operands = 0 : i64, tpu.core_type = #tpu.core_type<tc>, window_params = [{transform_indices = @transform_0, window_bounds = array<i64: 128, 64>}, {pipeline_mode = #tpu.pipeline_mode<synchronous>, transform_indices = @transform_1, window_bounds = array<i64: 64, 50>}, {pipeline_mode = #tpu.pipeline_mode<synchronous>, transform_indices = @transform_2, window_bounds = array<i64: 50, 20>}, {pipeline_mode = #tpu.pipeline_mode<synchronous>, transform_indices = @transform_3, window_bounds = array<i64: 20, 2>}, {pipeline_mode = #tpu.pipeline_mode<synchronous>, transform_indices = @transform_4, window_bounds = array<i64: 1, 50>}, {pipeline_mode = #tpu.pipeline_mode<synchronous>, transform_indices = @transform_5, window_bounds = array<i64: 1, 20>}, {pipeline_mode = #tpu.pipeline_mode<synchronous>, transform_indices = @transform_6, window_bounds = array<i64: 1, 2>}, {transform_indices = @transform_7, window_bounds = array<i64: 128, 2>}]} {
    %c0 = arith.constant 0 : index
    %c0_0 = arith.constant 0 : index
    %0 = vector.load %arg1[%c0, %c0_0] : memref<128x64xf32, #tpu.memory_space<vmem>>, vector<128x64xf32>
    %1 = arith.truncf %0 : vector<128x64xf32> to vector<128x64xbf16>
    %c0_1 = arith.constant 0 : index
    %c0_2 = arith.constant 0 : index
    %2 = vector.load %arg2[%c0_1, %c0_2] : memref<64x50xbf16, #tpu.memory_space<vmem>>, vector<64x50xbf16>
    %cst = arith.constant dense<0.000000e+00> : vector<128x50xf32>
    %3 = tpu.matmul %1, %2, %cst {dimension_numbers = #tpu.dot_dimension_numbers<[1], [0], [0], [1], [0, 0, 1, 1], [], []>} : vector<128x64xbf16>, vector<64x50xbf16>, vector<128x50xf32> -> vector<128x50xf32>
    %c0_3 = arith.constant 0 : index
    %c0_4 = arith.constant 0 : index
    %4 = vector.load %arg5[%c0_3, %c0_4] : memref<1x50xf32, #tpu.memory_space<vmem>>, vector<1x50xf32>
    %5 = vector.broadcast %4 : vector<1x50xf32> to vector<128x50xf32>
    %6 = arith.addf %3, %5 : vector<128x50xf32>
    %cst_5 = arith.constant 0.000000e+00 : f32
    %7 = vector.broadcast %cst_5 : f32 to vector<128x50xf32>
    %8 = arith.maximumf %6, %7 : vector<128x50xf32>
    %9 = arith.truncf %8 : vector<128x50xf32> to vector<128x50xbf16>
    %c0_6 = arith.constant 0 : index
    %c0_7 = arith.constant 0 : index
    %10 = vector.load %arg3[%c0_6, %c0_7] : memref<50x20xbf16, #tpu.memory_space<vmem>>, vector<50x20xbf16>
    %cst_8 = arith.constant dense<0.000000e+00> : vector<128x20xf32>
    %11 = tpu.matmul %9, %10, %cst_8 {dimension_numbers = #tpu.dot_dimension_numbers<[1], [0], [0], [1], [0, 0, 1, 1], [], []>} : vector<128x50xbf16>, vector<50x20xbf16>, vector<128x20xf32> -> vector<128x20xf32>
    %c0_9 = arith.constant 0 : index
    %c0_10 = arith.constant 0 : index
    %12 = vector.load %arg6[%c0_9, %c0_10] : memref<1x20xf32, #tpu.memory_space<vmem>>, vector<1x20xf32>
    %13 = vector.broadcast %12 : vector<1x20xf32> to vector<128x20xf32>
    %14 = arith.addf %11, %13 : vector<128x20xf32>
    %cst_11 = arith.constant 0.000000e+00 : f32
    %15 = vector.broadcast %cst_11 : f32 to vector<128x20xf32>
    %16 = arith.maximumf %14, %15 : vector<128x20xf32>
    %17 = arith.truncf %16 : vector<128x20xf32> to vector<128x20xbf16>
    %c0_12 = arith.constant 0 : index
    %c0_13 = arith.constant 0 : index
    %18 = vector.load %arg4[%c0_12, %c0_13] : memref<20x2xbf16, #tpu.memory_space<vmem>>, vector<20x2xbf16>
    %cst_14 = arith.constant dense<0.000000e+00> : vector<128x2xf32>
    %19 = tpu.matmul %17, %18, %cst_14 {dimension_numbers = #tpu.dot_dimension_numbers<[1], [0], [0], [1], [0, 0, 1, 1], [], []>} : vector<128x20xbf16>, vector<20x2xbf16>, vector<128x2xf32> -> vector<128x2xf32>
    %c0_15 = arith.constant 0 : index
    %c0_16 = arith.constant 0 : index
    %20 = vector.load %arg7[%c0_15, %c0_16] : memref<1x2xf32, #tpu.memory_space<vmem>>, vector<1x2xf32>
    %21 = vector.broadcast %20 : vector<1x2xf32> to vector<128x2xf32>
    %22 = arith.addf %19, %21 : vector<128x2xf32>
    %c0_17 = arith.constant 0 : index
    %c0_18 = arith.constant 0 : index
    %23 = vector.load %arg8[%c0_17, %c0_18] : memref<128x2xf32, #tpu.memory_space<vmem>>, vector<128x2xf32>
    tpu.vector_store %arg8[%c0_17, %c0_18], %22 {strides = array<i32>} : memref<128x2xf32, #tpu.memory_space<vmem>>, vector<128x2xf32>,
    return
  }
  func.func @transform_0(%arg0: i32) -> (i32, i32) {
    %c0_i32 = arith.constant 0 : i32
    %c0_i32_0 = arith.constant 0 : i32
    return %arg0, %c0_i32 : i32, i32
  }
  func.func @transform_1(%arg0: i32) -> (i32, i32) {
    %c0_i32 = arith.constant 0 : i32
    %c0_i32_0 = arith.constant 0 : i32
    %c0_i32_1 = arith.constant 0 : i32
    return %c0_i32, %c0_i32_0 : i32, i32
  }
  func.func @transform_2(%arg0: i32) -> (i32, i32) {
    %c0_i32 = arith.constant 0 : i32
    %c0_i32_0 = arith.constant 0 : i32
    %c0_i32_1 = arith.constant 0 : i32
    return %c0_i32, %c0_i32_0 : i32, i32
  }
  func.func @transform_3(%arg0: i32) -> (i32, i32) {
    %c0_i32 = arith.constant 0 : i32
    %c0_i32_0 = arith.constant 0 : i32
    %c0_i32_1 = arith.constant 0 : i32
    return %c0_i32, %c0_i32_0 : i32, i32
  }
  func.func @transform_4(%arg0: i32) -> (i32, i32) {
    %c0_i32 = arith.constant 0 : i32
    %c0_i32_0 = arith.constant 0 : i32
    %c0_i32_1 = arith.constant 0 : i32
    return %c0_i32, %c0_i32_0 : i32, i32
  }
  func.func @transform_5(%arg0: i32) -> (i32, i32) {
    %c0_i32 = arith.constant 0 : i32
    %c0_i32_0 = arith.constant 0 : i32
    %c0_i32_1 = arith.constant 0 : i32
    return %c0_i32, %c0_i32_0 : i32, i32
  }
  func.func @transform_6(%arg0: i32) -> (i32, i32) {
    %c0_i32 = arith.constant 0 : i32
    %c0_i32_0 = arith.constant 0 : i32
    %c0_i32_1 = arith.constant 0 : i32
    return %c0_i32, %c0_i32_0 : i32, i32
  }
  func.func @transform_7(%arg0: i32) -> (i32, i32) {
    %c0_i32 = arith.constant 0 : i32
    %c0_i32_0 = arith.constant 0 : i32
    return %arg0, %c0_i32 : i32, i32
  }
}

</mosaic_0001>

<llo_original>
// kernel: decoder_forward.1
$region0: #{decoder_forward.1}
  #allocation0 [shape = 'u32[]', space=smem, size = 0x4, offset = 0x4, fixed_abs, tag = 'smem constant byte address 0x4 - core index']
  #allocation1 [shape = 'u32[144,128]{1,0:T(1,128)}', space=vmem, size = 0x12000, scoped, tag = 'internal scratch']
  %s0 = inlined_call_operand.vmem [shape: f32[128,64], index: 0, kind: input, shape index: {}]
  %s1 = inlined_call_operand.vmem [shape: bf16[64,50], index: 1, kind: input, shape index: {}]
  %s2 = inlined_call_operand.vmem [shape: bf16[50,20], index: 2, kind: input, shape index: {}]
  %s3 = inlined_call_operand.vmem [shape: bf16[20,2], index: 3, kind: input, shape index: {}]
  %s4 = inlined_call_operand.vmem [shape: f32[1,50], index: 4, kind: input, shape index: {}]
  %s5 = inlined_call_operand.vmem [shape: f32[1,20], index: 5, kind: input, shape index: {}]
  %s6 = inlined_call_operand.vmem [shape: f32[1,2], index: 6, kind: input, shape index: {}]
  %s7 = inlined_call_operand.vmem [shape: f32[128,2], index: 7, kind: output, shape index: {}]
  %s8 = sld [smem:[#allocation0]]
  $region38: #{decoder_forward.1} parent=0
    _
  %s10 = ssub.s32 1, %s8
  %s11 = scalar_select 0, %s10, %s8
  // Predicated region
  $region2: #{decoder_forward.1} parent=0 // pred_check
    _
  $region3: #{decoder_forward.1} parent=0 // pred_check_branch
    %13 = sbr.rel (0) target = $region5
  $region4: #{decoder_forward.1} parent=0 // pred_region
    _
  $region5: #{decoder_forward.1} parent=0 // pred_fallthru
    _
  // Predicated region
  $region6: #{decoder_forward.1} parent=0 // pred_check
    _
  $region7: #{decoder_forward.1} parent=0 // pred_check_branch
    %15 = sbr.rel (0) target = $region9
  $region8: #{decoder_forward.1} parent=0 // pred_region
    _
  $region9: #{decoder_forward.1} parent=0 // pred_fallthru
    _
  // Predicated region
  $region10: #{decoder_forward.1} parent=0 // pred_check
    _
  $region11: #{decoder_forward.1} parent=0 // pred_check_branch
    %17 = sbr.rel (0) target = $region13
  $region12: #{decoder_forward.1} parent=0 // pred_region
    _
  $region13: #{decoder_forward.1} parent=0 // pred_fallthru
    _
  // Predicated region
  $region14: #{decoder_forward.1} parent=0 // pred_check
    _
  $region15: #{decoder_forward.1} parent=0 // pred_check_branch
    %19 = sbr.rel (0) target = $region17
  $region16: #{decoder_forward.1} parent=0 // pred_region
    _
  $region17: #{decoder_forward.1} parent=0 // pred_fallthru
    _
  // Predicated region
  $region18: #{decoder_forward.1} parent=0 // pred_check
    _
  $region19: #{decoder_forward.1} parent=0 // pred_check_branch
    %21 = sbr.rel (0) target = $region21
  $region20: #{decoder_forward.1} parent=0 // pred_region
    _
  $region21: #{decoder_forward.1} parent=0 // pred_fallthru
    _
  // Predicated region
  $region22: #{decoder_forward.1} parent=0 // pred_check
    _
  $region23: #{decoder_forward.1} parent=0 // pred_check_branch
    %23 = sbr.rel (0) target = $region25
  $region24: #{decoder_forward.1} parent=0 // pred_region
    _
  $region25: #{decoder_forward.1} parent=0 // pred_fallthru
    _
  // Predicated region
  $region26: #{decoder_forward.1} parent=0 // pred_check
    _
  $region27: #{decoder_forward.1} parent=0 // pred_check_branch
    %25 = sbr.rel (0) target = $region29
  $region28: #{decoder_forward.1} parent=0 // pred_region
    _
  $region29: #{decoder_forward.1} parent=0 // pred_fallthru
    _
  %v27 = vld [vmem:[%s0] sm:$0xff]
  %v28 = vld [vmem:[%s0 + $0x8] sm:$0xff]
  %v29 = vld [vmem:[%s0 + $0x10] sm:$0xff]
  %v30 = vld [vmem:[%s0 + $0x18] sm:$0xff]
  %v31 = vld [vmem:[%s0 + $0x20] sm:$0xff]
  %v32 = vld [vmem:[%s0 + $0x28] sm:$0xff]
  %v33 = vld [vmem:[%s0 + $0x30] sm:$0xff]
  %v34 = vld [vmem:[%s0 + $0x38] sm:$0xff]
  %v35 = vld [vmem:[%s0 + $0x40] sm:$0xff]
  %v36 = vld [vmem:[%s0 + $0x48] sm:$0xff]
  %v37 = vld [vmem:[%s0 + $0x50] sm:$0xff]
  %v38 = vld [vmem:[%s0 + $0x58] sm:$0xff]
  %v39 = vld [vmem:[%s0 + $0x60] sm:$0xff]
  %v40 = vld [vmem:[%s0 + $0x68] sm:$0xff]
  %v41 = vld [vmem:[%s0 + $0x70] sm:$0xff]
  %v42 = vld [vmem:[%s0 + $0x78] sm:$0xff]
  %v43 = vpack.c.bf16 %v28, %v27
  %v44 = vpack.c.bf16 %v30, %v29
  %v45 = vpack.c.bf16 %v32, %v31
  %v46 = vpack.c.bf16 %v34, %v33
  %v47 = vpack.c.bf16 %v36, %v35
  %v48 = vpack.c.bf16 %v38, %v37
  %v49 = vpack.c.bf16 %v40, %v39
  %v50 = vpack.c.bf16 %v42, %v41
  %v51 = vld [vmem:[%s1] sm:$0xf]
  %v52 = vld [vmem:[%s1 + $0x4] sm:$0xf]
  %v53 = vld [vmem:[%s1 + $0x8] sm:$0xf]
  %v54 = vld [vmem:[%s1 + $0xc] sm:$0xf]
  %v55 = vld [vmem:[%s1 + $0x10] sm:$0xf]
  %v56 = vld [vmem:[%s1 + $0x14] sm:$0xf]
  %v57 = vld [vmem:[%s1 + $0x18] sm:$0xf]
  %v58 = vld [vmem:[%s1 + $0x1c] sm:$0xf]
  %v59 = vld [vmem:[%s4] sm:$0x1]
  %v61 = vlaneseq
  %v62 = vshrl.u32 %v61, 7
  %v63 = vsub.s32 0, %v62
  %v64 = vrot.slane %v59, %v63
  %v74 = vunpack.c.l.b16 %v51
  %v75 = vunpack.c.l.b16 %v52
  %v76 = vunpack.c.l.b16 %v53
  %v77 = vunpack.c.l.b16 %v54
  %v78 = vunpack.c.l.b16 %v55
  %v79 = vunpack.c.l.b16 %v56
  %v80 = vunpack.c.l.b16 %v57
  %v81 = vunpack.c.l.b16 %v58
  %v82 = vpack.c.b16 %v75, %v74
  %v83 = vpack.c.b16 %v77, %v76
  %v84 = vpack.c.b16 %v79, %v78
  %v85 = vpack.c.b16 %v81, %v80
  %vm90 = vcmask 523264
  %v92 = vsel %vm90, %v43, 0
  %v95 = vsel %vm90, %v44, 0
  %v98 = vsel %vm90, %v45, 0
  %v101 = vsel %vm90, %v46, 0
  %v104 = vsel %vm90, %v47, 0
  %v107 = vsel %vm90, %v48, 0
  %v110 = vsel %vm90, %v49, 0
  %v113 = vsel %vm90, %v50, 0
  %115 = vmatprep.subr.bf16.mxu0 0
  %116 = vmatpush1.bf16.msra.mxu0 %v82
  %117 = vmatprep.subr.bf16.mxu0 0
  %118 = vmatpush1.bf16.msra.mxu0 %v83
  %119 = vmatprep.subr.bf16.mxu0 0
  %120 = vmatpush1.bf16.msra.mxu0 %v84
  %121 = vmatprep.subr.bf16.mxu0 0
  %122 = vmatpush1.bf16.msra.mxu0 %v85
  %123 = vmatprep.subr.bf16.mxu0 0
  %124 = vmatpush1.bf16.msra.mxu0 0
  %125 = vmatprep.subr.bf16.mxu0 0
  %126 = vmatpush1.bf16.msra.mxu0 0
  %127 = vmatprep.subr.bf16.mxu0 0
  %128 = vmatpush1.bf16.msra.mxu0 0
  %129 = vmatprep.subr.bf16.mxu0 0
  %130 = vmatpush1.bf16.msra.mxu0 0
  %131 = vmatprep.subr.bf16.mxu0 0
  %132 = vmatpush1.bf16.msra.mxu0 0
  %133 = vmatprep.subr.bf16.mxu0 0
  %134 = vmatpush1.bf16.msra.mxu0 0
  %135 = vmatprep.subr.bf16.mxu0 0
  %136 = vmatpush1.bf16.msra.mxu0 0
  %137 = vmatprep.subr.bf16.mxu0 0
  %138 = vmatpush1.bf16.msra.mxu0 0
  %139 = vmatprep.subr.bf16.mxu0 0
  %140 = vmatpush1.bf16.msra.mxu0 0
  %141 = vmatprep.subr.bf16.mxu0 0
  %142 = vmatpush1.bf16.msra.mxu0 0
  %143 = vmatprep.subr.bf16.mxu0 0
  %144 = vmatpush1.bf16.msra.mxu0 0
  %145 = vmatprep.subr.bf16.mxu0 0
  %146 = vmatpush1.bf16.msra.mxu0 0
  %147 = vmatprep.mubr.bf16.mxu0 0
  %148 = vmatmul.mubr.bf16.gmra.mrb[0].mxu0 %v92
  %v149 = vpop.f32.mrb[0].mxu0
  %v150 = vadd.f32 %v64, %v149
  %v151 = vpop.f32.mrb[0].mxu0
  %v152 = vpop.f32.mrb[0].mxu0
  %v153 = vadd.f32 %v64, %v152
  %v154 = vpop.f32.mrb[0].mxu0
  %155 = vmatprep.mubr.bf16.mxu0 0
  %156 = vmatmul.mubr.bf16.gmra.mrb[0].mxu0 %v95
  %v157 = vpop.f32.mrb[0].mxu0
  %v158 = vadd.f32 %v64, %v157
  %v159 = vpop.f32.mrb[0].mxu0
  %v160 = vpop.f32.mrb[0].mxu0
  %v161 = vadd.f32 %v64, %v160
  %v162 = vpop.f32.mrb[0].mxu0
  %163 = vmatprep.mubr.bf16.mxu0 0
  %164 = vmatmul.mubr.bf16.gmra.mrb[0].mxu0 %v98
  %v165 = vpop.f32.mrb[0].mxu0
  %v166 = vadd.f32 %v64, %v165
  %v167 = vpop.f32.mrb[0].mxu0
  %v168 = vpop.f32.mrb[0].mxu0
  %v169 = vadd.f32 %v64, %v168
  %v170 = vpop.f32.mrb[0].mxu0
  %171 = vmatprep.mubr.bf16.mxu0 0
  %172 = vmatmul.mubr.bf16.gmra.mrb[0].mxu0 %v101
  %v173 = vpop.f32.mrb[0].mxu0
  %v174 = vadd.f32 %v64, %v173
  %v175 = vpop.f32.mrb[0].mxu0
  %v176 = vpop.f32.mrb[0].mxu0
  %v177 = vadd.f32 %v64, %v176
  %v178 = vpop.f32.mrb[0].mxu0
  %179 = vmatprep.mubr.bf16.mxu0 0
  %180 = vmatmul.mubr.bf16.gmra.mrb[0].mxu0 %v104
  %v181 = vpop.f32.mrb[0].mxu0
  %v182 = vadd.f32 %v64, %v181
  %v183 = vpop.f32.mrb[0].mxu0
  %v184 = vpop.f32.mrb[0].mxu0
  %v185 = vadd.f32 %v64, %v184
  %v186 = vpop.f32.mrb[0].mxu0
  %187 = vmatprep.mubr.bf16.mxu0 0
  %188 = vmatmul.mubr.bf16.gmra.mrb[0].mxu0 %v107
  %v189 = vpop.f32.mrb[0].mxu0
  %v190 = vadd.f32 %v64, %v189
  %v191 = vpop.f32.mrb[0].mxu0
  %v192 = vpop.f32.mrb[0].mxu0
  %v193 = vadd.f32 %v64, %v192
  %v194 = vpop.f32.mrb[0].mxu0
  %195 = vmatprep.mubr.bf16.mxu0 0
  %196 = vmatmul.mubr.bf16.gmra.mrb[0].mxu0 %v110
  %v197 = vpop.f32.mrb[0].mxu0
  %v198 = vadd.f32 %v64, %v197
  %v199 = vpop.f32.mrb[0].mxu0
  %v200 = vpop.f32.mrb[0].mxu0
  %v201 = vadd.f32 %v64, %v200
  %v202 = vpop.f32.mrb[0].mxu0
  %203 = vmatprep.mubr.bf16.mxu0 0
  %204 = vmatmul.mubr.bf16.gmra.mrb[0].mxu0 %v113
  %v205 = vpop.f32.mrb[0].mxu0
  %v206 = vadd.f32 %v64, %v205
  %v207 = vpop.f32.mrb[0].mxu0
  %v208 = vpop.f32.mrb[0].mxu0
  %v209 = vadd.f32 %v64, %v208
  %v210 = vpop.f32.mrb[0].mxu0
  %211 = vdwg.mxu0
  %v212 = vmax.f32 %v150, 0.0
  %v213 = vmax.f32 %v153, 0.0
  %v214 = vmax.f32 %v158, 0.0
  %v215 = vmax.f32 %v161, 0.0
  %v216 = vmax.f32 %v166, 0.0
  %v217 = vmax.f32 %v169, 0.0
  %v218 = vmax.f32 %v174, 0.0
  %v219 = vmax.f32 %v177, 0.0
  %v220 = vmax.f32 %v182, 0.0
  %v221 = vmax.f32 %v185, 0.0
  %v222 = vmax.f32 %v190, 0.0
  %v223 = vmax.f32 %v193, 0.0
  %v224 = vmax.f32 %v198, 0.0
  %v225 = vmax.f32 %v201, 0.0
  %v226 = vmax.f32 %v206, 0.0
  %v227 = vmax.f32 %v209, 0.0
  %v228 = vpack.c.bf16 %v213, %v212
  %v229 = vpack.c.bf16 %v215, %v214
  %v230 = vpack.c.bf16 %v217, %v216
  %v231 = vpack.c.bf16 %v219, %v218
  %v232 = vpack.c.bf16 %v221, %v220
  %v233 = vpack.c.bf16 %v223, %v222
  %v234 = vpack.c.bf16 %v225, %v224
  %v235 = vpack.c.bf16 %v227, %v226
  %v236 = vld [vmem:[%s2] sm:$0xf]
  %v237 = vld [vmem:[%s2 + $0x4] sm:$0xf]
  %v238 = vld [vmem:[%s2 + $0x8] sm:$0xf]
  %v239 = vld [vmem:[%s2 + $0xc] sm:$0xf]
  %v240 = vld [vmem:[%s2 + $0x10] sm:$0xf]
  %v241 = vld [vmem:[%s2 + $0x14] sm:$0xf]
  %v242 = vld [vmem:[%s2 + $0x18] sm:$0x1]
  %v243 = vld [vmem:[%s5] sm:$0x1]
  %v245 = vlaneseq
  %v246 = vshrl.u32 %v245, 7
  %v247 = vsub.s32 0, %v246
  %v248 = vrot.slane %v243, %v247
  %v257 = vunpack.c.l.b16 %v236
  %v258 = vunpack.c.l.b16 %v237
  %v259 = vunpack.c.l.b16 %v238
  %v260 = vunpack.c.l.b16 %v239
  %v261 = vunpack.c.l.b16 %v240
  %v262 = vunpack.c.l.b16 %v241
  %v263 = vunpack.c.l.b16 %v242
  %v264 = vpack.c.b16 %v258, %v257
  %v265 = vpack.c.b16 %v260, %v259
  %v266 = vpack.c.b16 %v262, %v261
  %v267 = vpack.c.b16 %v263, %v263
  %vm271 = vcmask 408576
  %v273 = vsel %vm271, %v228, 0
  %v276 = vsel %vm271, %v229, 0
  %v279 = vsel %vm271, %v230, 0
  %v282 = vsel %vm271, %v231, 0
  %v285 = vsel %vm271, %v232, 0
  %v288 = vsel %vm271, %v233, 0
  %v291 = vsel %vm271, %v234, 0
  %v294 = vsel %vm271, %v235, 0
  %vm296 = vcmask 1040384
  %v298 = vsel %vm296, %v267, 0
  %300 = vmatprep.subr.bf16.mxu0 0
  %301 = vmatpush1.bf16.msra.mxu0 %v264
  %302 = vmatprep.subr.bf16.mxu0 0
  %303 = vmatpush1.bf16.msra.mxu0 %v265
  %304 = vmatprep.subr.bf16.mxu0 0
  %305 = vmatpush1.bf16.msra.mxu0 %v266
  %306 = vmatprep.subr.bf16.mxu0 0
  %307 = vmatpush1.bf16.msra.mxu0 %v298
  %308 = vmatprep.subr.bf16.mxu0 0
  %309 = vmatpush1.bf16.msra.mxu0 0
  %310 = vmatprep.subr.bf16.mxu0 0
  %311 = vmatpush1.bf16.msra.mxu0 0
  %312 = vmatprep.subr.bf16.mxu0 0
  %313 = vmatpush1.bf16.msra.mxu0 0
  %314 = vmatprep.subr.bf16.mxu0 0
  %315 = vmatpush1.bf16.msra.mxu0 0
  %316 = vmatprep.subr.bf16.mxu0 0
  %317 = vmatpush1.bf16.msra.mxu0 0
  %318 = vmatprep.subr.bf16.mxu0 0
  %319 = vmatpush1.bf16.msra.mxu0 0
  %320 = vmatprep.subr.bf16.mxu0 0
  %321 = vmatpush1.bf16.msra.mxu0 0
  %322 = vmatprep.subr.bf16.mxu0 0
  %323 = vmatpush1.bf16.msra.mxu0 0
  %324 = vmatprep.subr.bf16.mxu0 0
  %325 = vmatpush1.bf16.msra.mxu0 0
  %326 = vmatprep.subr.bf16.mxu0 0
  %327 = vmatpush1.bf16.msra.mxu0 0
  %328 = vmatprep.subr.bf16.mxu0 0
  %329 = vmatpush1.bf16.msra.mxu0 0
  %330 = vmatprep.subr.bf16.mxu0 0
  %331 = vmatpush1.bf16.msra.mxu0 0
  %332 = vmatprep.mubr.bf16.mxu0 0
  %333 = vmatmul.mubr.bf16.gmra.mrb[0].mxu0 %v273
  %v334 = vpop.f32.mrb[0].mxu0
  %v335 = vadd.f32 %v248, %v334
  %v336 = vpop.f32.mrb[0].mxu0
  %v337 = vpop.f32.mrb[0].mxu0
  %v338 = vadd.f32 %v248, %v337
  %v339 = vpop.f32.mrb[0].mxu0
  %340 = vmatprep.mubr.bf16.mxu0 0
  %341 = vmatmul.mubr.bf16.gmra.mrb[0].mxu0 %v276
  %v342 = vpop.f32.mrb[0].mxu0
  %v343 = vadd.f32 %v248, %v342
  %v344 = vpop.f32.mrb[0].mxu0
  %v345 = vpop.f32.mrb[0].mxu0
  %v346 = vadd.f32 %v248, %v345
  %v347 = vpop.f32.mrb[0].mxu0
  %348 = vmatprep.mubr.bf16.mxu0 0
  %349 = vmatmul.mubr.bf16.gmra.mrb[0].mxu0 %v279
  %v350 = vpop.f32.mrb[0].mxu0
  %v351 = vadd.f32 %v248, %v350
  %v352 = vpop.f32.mrb[0].mxu0
  %v353 = vpop.f32.mrb[0].mxu0
  %v354 = vadd.f32 %v248, %v353
  %v355 = vpop.f32.mrb[0].mxu0
  %356 = vmatprep.mubr.bf16.mxu0 0
  %357 = vmatmul.mubr.bf16.gmra.mrb[0].mxu0 %v282
  %v358 = vpop.f32.mrb[0].mxu0
  %v359 = vadd.f32 %v248, %v358
  %v360 = vpop.f32.mrb[0].mxu0
  %v361 = vpop.f32.mrb[0].mxu0
  %v362 = vadd.f32 %v248, %v361
  %v363 = vpop.f32.mrb[0].mxu0
  %364 = vmatprep.mubr.bf16.mxu0 0
  %365 = vmatmul.mubr.bf16.gmra.mrb[0].mxu0 %v285
  %v366 = vpop.f32.mrb[0].mxu0
  %v367 = vadd.f32 %v248, %v366
  %v368 = vpop.f32.mrb[0].mxu0
  %v369 = vpop.f32.mrb[0].mxu0
  %v370 = vadd.f32 %v248, %v369
  %v371 = vpop.f32.mrb[0].mxu0
  %372 = vmatprep.mubr.bf16.mxu0 0
  %373 = vmatmul.mubr.bf16.gmra.mrb[0].mxu0 %v288
  %v374 = vpop.f32.mrb[0].mxu0
  %v375 = vadd.f32 %v248, %v374
  %v376 = vpop.f32.mrb[0].mxu0
  %v377 = vpop.f32.mrb[0].mxu0
  %v378 = vadd.f32 %v248, %v377
  %v379 = vpop.f32.mrb[0].mxu0
  %380 = vmatprep.mubr.bf16.mxu0 0
  %381 = vmatmul.mubr.bf16.gmra.mrb[0].mxu0 %v291
  %v382 = vpop.f32.mrb[0].mxu0
  %v383 = vadd.f32 %v248, %v382
  %v384 = vpop.f32.mrb[0].mxu0
  %v385 = vpop.f32.mrb[0].mxu0
  %v386 = vadd.f32 %v248, %v385
  %v387 = vpop.f32.mrb[0].mxu0
  %388 = vmatprep.mubr.bf16.mxu0 0
  %389 = vmatmul.mubr.bf16.gmra.mrb[0].mxu0 %v294
  %v390 = vpop.f32.mrb[0].mxu0
  %v391 = vadd.f32 %v248, %v390
  %v392 = vpop.f32.mrb[0].mxu0
  %v393 = vpop.f32.mrb[0].mxu0
  %v394 = vadd.f32 %v248, %v393
  %v395 = vpop.f32.mrb[0].mxu0
  %396 = vdwg.mxu0
  %v397 = vmax.f32 %v335, 0.0
  %v398 = vmax.f32 %v338, 0.0
  %v399 = vmax.f32 %v343, 0.0
  %v400 = vmax.f32 %v346, 0.0
  %v401 = vmax.f32 %v351, 0.0
  %v402 = vmax.f32 %v354, 0.0
  %v403 = vmax.f32 %v359, 0.0
  %v404 = vmax.f32 %v362, 0.0
  %v405 = vmax.f32 %v367, 0.0
  %v406 = vmax.f32 %v370, 0.0
  %v407 = vmax.f32 %v375, 0.0
  %v408 = vmax.f32 %v378, 0.0
  %v409 = vmax.f32 %v383, 0.0
  %v410 = vmax.f32 %v386, 0.0
  %v411 = vmax.f32 %v391, 0.0
  %v412 = vmax.f32 %v394, 0.0
  %v413 = vpack.c.bf16 %v398, %v397
  %v414 = vpack.c.bf16 %v400, %v399
  %v415 = vpack.c.bf16 %v402, %v401
  %v416 = vpack.c.bf16 %v404, %v403
  %v417 = vpack.c.bf16 %v406, %v405
  %v418 = vpack.c.bf16 %v408, %v407
  %v419 = vpack.c.bf16 %v410, %v409
  %v420 = vpack.c.bf16 %v412, %v411
  %v421 = vld [vmem:[%s3] sm:$0xf]
  %v422 = vld [vmem:[%s3 + $0x4] sm:$0xf]
  %v423 = vld [vmem:[%s3 + $0x8] sm:$0x3]
  %v424 = vld [vmem:[%s6] sm:$0x1]
  %v426 = vlaneseq
  %v427 = vshrl.u32 %v426, 7
  %v428 = vsub.s32 0, %v427
  %v429 = vrot.slane %v424, %v428
  %v434 = vunpack.c.l.b16 %v421
  %v435 = vunpack.c.l.b16 %v422
  %v436 = vunpack.c.l.b16 %v423
  %v437 = vpack.c.b16 %v435, %v434
  %v438 = vpack.c.b16 %v436, %v436
  %vm440 = vcmask 162816
  %v442 = vsel %vm440, %v413, 0
  %v445 = vsel %vm440, %v414, 0
  %v448 = vsel %vm440, %v415, 0
  %v451 = vsel %vm440, %v416, 0
  %v454 = vsel %vm440, %v417, 0
  %v457 = vsel %vm440, %v418, 0
  %v460 = vsel %vm440, %v419, 0
  %v463 = vsel %vm440, %v420, 0
  %vm465 = vcmask 1041408
  %v467 = vsel %vm465, %v438, 0
  %469 = vmatprep.subr.bf16.mxu0 0
  %470 = vmatpush1.bf16.msra.mxu0 %v437
  %471 = vmatprep.subr.bf16.mxu0 0
  %472 = vmatpush1.bf16.msra.mxu0 %v467
  %473 = vmatprep.subr.bf16.mxu0 0
  %474 = vmatpush1.bf16.msra.mxu0 0
  %475 = vmatprep.subr.bf16.mxu0 0
  %476 = vmatpush1.bf16.msra.mxu0 0
  %477 = vmatprep.subr.bf16.mxu0 0
  %478 = vmatpush1.bf16.msra.mxu0 0
  %479 = vmatprep.subr.bf16.mxu0 0
  %480 = vmatpush1.bf16.msra.mxu0 0
  %481 = vmatprep.subr.bf16.mxu0 0
  %482 = vmatpush1.bf16.msra.mxu0 0
  %483 = vmatprep.subr.bf16.mxu0 0
  %484 = vmatpush1.bf16.msra.mxu0 0
  %485 = vmatprep.subr.bf16.mxu0 0
  %486 = vmatpush1.bf16.msra.mxu0 0
  %487 = vmatprep.subr.bf16.mxu0 0
  %488 = vmatpush1.bf16.msra.mxu0 0
  %489 = vmatprep.subr.bf16.mxu0 0
  %490 = vmatpush1.bf16.msra.mxu0 0
  %491 = vmatprep.subr.bf16.mxu0 0
  %492 = vmatpush1.bf16.msra.mxu0 0
  %493 = vmatprep.subr.bf16.mxu0 0
  %494 = vmatpush1.bf16.msra.mxu0 0
  %495 = vmatprep.subr.bf16.mxu0 0
  %496 = vmatpush1.bf16.msra.mxu0 0
  %497 = vmatprep.subr.bf16.mxu0 0
  %498 = vmatpush1.bf16.msra.mxu0 0
  %499 = vmatprep.subr.bf16.mxu0 0
  %500 = vmatpush1.bf16.msra.mxu0 0
  %501 = vmatprep.mubr.bf16.mxu0 0
  %502 = vmatmul.mubr.bf16.gmra.mrb[0].mxu0 %v442
  %v503 = vpop.f32.mrb[0].mxu0
  %v504 = vadd.f32 %v429, %v503
  %v505 = vpop.f32.mrb[0].mxu0
  %v506 = vpop.f32.mrb[0].mxu0
  %v507 = vadd.f32 %v429, %v506
  %v508 = vpop.f32.mrb[0].mxu0
  %509 = vmatprep.mubr.bf16.mxu0 0
  %510 = vmatmul.mubr.bf16.gmra.mrb[0].mxu0 %v445
  %v511 = vpop.f32.mrb[0].mxu0
  %v512 = vadd.f32 %v429, %v511
  %v513 = vpop.f32.mrb[0].mxu0
  %v514 = vpop.f32.mrb[0].mxu0
  %v515 = vadd.f32 %v429, %v514
  %v516 = vpop.f32.mrb[0].mxu0
  %517 = vmatprep.mubr.bf16.mxu0 0
  %518 = vmatmul.mubr.bf16.gmra.mrb[0].mxu0 %v448
  %v519 = vpop.f32.mrb[0].mxu0
  %v520 = vadd.f32 %v429, %v519
  %v521 = vpop.f32.mrb[0].mxu0
  %v522 = vpop.f32.mrb[0].mxu0
  %v523 = vadd.f32 %v429, %v522
  %v524 = vpop.f32.mrb[0].mxu0
  %525 = vmatprep.mubr.bf16.mxu0 0
  %526 = vmatmul.mubr.bf16.gmra.mrb[0].mxu0 %v451
  %v527 = vpop.f32.mrb[0].mxu0
  %v528 = vadd.f32 %v429, %v527
  %v529 = vpop.f32.mrb[0].mxu0
  %v530 = vpop.f32.mrb[0].mxu0
  %v531 = vadd.f32 %v429, %v530
  %v532 = vpop.f32.mrb[0].mxu0
  %533 = vmatprep.mubr.bf16.mxu0 0
  %534 = vmatmul.mubr.bf16.gmra.mrb[0].mxu0 %v454
  %v535 = vpop.f32.mrb[0].mxu0
  %v536 = vadd.f32 %v429, %v535
  %v537 = vpop.f32.mrb[0].mxu0
  %v538 = vpop.f32.mrb[0].mxu0
  %v539 = vadd.f32 %v429, %v538
  %v540 = vpop.f32.mrb[0].mxu0
  %541 = vmatprep.mubr.bf16.mxu0 0
  %542 = vmatmul.mubr.bf16.gmra.mrb[0].mxu0 %v457
  %v543 = vpop.f32.mrb[0].mxu0
  %v544 = vadd.f32 %v429, %v543
  %v545 = vpop.f32.mrb[0].mxu0
  %v546 = vpop.f32.mrb[0].mxu0
  %v547 = vadd.f32 %v429, %v546
  %v548 = vpop.f32.mrb[0].mxu0
  %549 = vmatprep.mubr.bf16.mxu0 0
  %550 = vmatmul.mubr.bf16.gmra.mrb[0].mxu0 %v460
  %v551 = vpop.f32.mrb[0].mxu0
  %v552 = vadd.f32 %v429, %v551
  %v553 = vpop.f32.mrb[0].mxu0
  %v554 = vpop.f32.mrb[0].mxu0
  %v555 = vadd.f32 %v429, %v554
  %v556 = vpop.f32.mrb[0].mxu0
  %557 = vmatprep.mubr.bf16.mxu0 0
  %558 = vmatmul.mubr.bf16.gmra.mrb[0].mxu0 %v463
  %v559 = vpop.f32.mrb[0].mxu0
  %v560 = vadd.f32 %v429, %v559
  %v561 = vpop.f32.mrb[0].mxu0
  %v562 = vpop.f32.mrb[0].mxu0
  %v563 = vadd.f32 %v429, %v562
  %v564 = vpop.f32.mrb[0].mxu0
  %565 = vdwg.mxu0
  %vm566 = vcmask 15360
  %567 = vst.msk [vmem:[%s7] sm:$0xff] %vm566, %v504
  %568 = vst.msk [vmem:[%s7 + $0x8] sm:$0xff] %vm566, %v507
  %569 = vst.msk [vmem:[%s7 + $0x10] sm:$0xff] %vm566, %v512
  %570 = vst.msk [vmem:[%s7 + $0x18] sm:$0xff] %vm566, %v515
  %571 = vst.msk [vmem:[%s7 + $0x20] sm:$0xff] %vm566, %v520
  %572 = vst.msk [vmem:[%s7 + $0x28] sm:$0xff] %vm566, %v523
  %573 = vst.msk [vmem:[%s7 + $0x30] sm:$0xff] %vm566, %v528
  %574 = vst.msk [vmem:[%s7 + $0x38] sm:$0xff] %vm566, %v531
  %575 = vst.msk [vmem:[%s7 + $0x40] sm:$0xff] %vm566, %v536
  %576 = vst.msk [vmem:[%s7 + $0x48] sm:$0xff] %vm566, %v539
  %577 = vst.msk [vmem:[%s7 + $0x50] sm:$0xff] %vm566, %v544
  %578 = vst.msk [vmem:[%s7 + $0x58] sm:$0xff] %vm566, %v547
  %579 = vst.msk [vmem:[%s7 + $0x60] sm:$0xff] %vm566, %v552
  %580 = vst.msk [vmem:[%s7 + $0x68] sm:$0xff] %vm566, %v555
  %581 = vst.msk [vmem:[%s7 + $0x70] sm:$0xff] %vm566, %v560
  %582 = vst.msk [vmem:[%s7 + $0x78] sm:$0xff] %vm566, %v563
  // Predicated region
  $region30: #{decoder_forward.1} parent=0 // pred_check
    _
  $region31: #{decoder_forward.1} parent=0 // pred_check_branch
    %584 = sbr.rel (0) target = $region33
  $region32: #{decoder_forward.1} parent=0 // pred_region
    _
  $region33: #{decoder_forward.1} parent=0 // pred_fallthru
    _
  // Predicated region
  $region34: #{decoder_forward.1} parent=0 // pred_check
    _
  $region35: #{decoder_forward.1} parent=0 // pred_check_branch
    %586 = sbr.rel (0) target = $region37
  $region36: #{decoder_forward.1} parent=0 // pred_region
    _
  $region37: #{decoder_forward.1} parent=0 // pred_fallthru
    _

</llo_original>
